<compile_context>
chip_gen: v6e
topology: v6e:2x2x1
jax: 0.10.0
libtpu: 0.0.40
codegen_flags: <defaults>
</compile_context>

<pallas_src>
import numpy as np
import jax
import jax.numpy as jnp
from jax.experimental import pallas as pl
from jax.experimental.pallas import tpu as pltpu


def _round_up(x, m):
    return (x + m - 1) // m * m


# --------------------------------------------------------------------------
# kernel
# --------------------------------------------------------------------------
def _make_stft_kernel(C, TT):
    def kernel(s_ref, t_ref, w_ref, o_ref, sall_ref):
        # s_ref : (1, TT,   hop)  signal rows  [ j*TT      , j*TT+TT        )
        # t_ref : (1, Cpad, hop)  overlap rows [ (j+1)*TT  , (j+1)*TT+Cpad  )
        # w_ref : (C, hop, Fp)    window-folded DFT basis, K-split by hop
        # o_ref : (1, TT, Fp)     packed [cos | -sin] spectrum tile
        # sall  : (TT+Cpad, hop)  contiguous span scratch
        sall_ref[:TT, :] = s_ref[0]
        sall_ref[TT:, :] = t_ref[0]
        # frame t of this tile uses signal rows t .. t+C-1 of the span:
        #   out = sum_c  span[c : c+TT, :] @ W[c]
        o_ref[0] = jnp.dot(s_ref[0], w_ref[0],
                           preferred_element_type=jnp.float32)
        for c in range(1, C):
            o_ref[0] += jnp.dot(sall_ref[c:c + TT, :], w_ref[c],
                                preferred_element_type=jnp.float32)
    return kernel


def _stft_pallas(sig, basis, TT, Cpad, nT):
    """sig: (B, U, hop), basis: (C, hop, Fp) -> (B, nT*TT, Fp) float32."""
    B, U, hop = sig.shape
    C, _, Fp = basis.shape
    itemsize = jnp.dtype(sig.dtype).itemsize

    hop_l = _round_up(hop, 128)           # lane-padded VMEM footprint
    hop_s = _round_up(hop, 8)
    vmem = ((2 * TT + 2 * Cpad + (TT + Cpad)) * hop_l * itemsize     # sig bufs + scratch
            + 2 * C * hop_s * Fp * itemsize                           # resident basis (dbuf)
            + 2 * TT * Fp * 4)                                        # out tile (dbuf)
    vmem_limit = int(min(max(int(1.4 * vmem), 32 * 1024 * 1024), 64 * 1024 * 1024))

    flops = 2 * B * nT * TT * (C * hop) * Fp
    bytes_accessed = int(sig.size * itemsize + basis.size * itemsize
                         + B * nT * TT * Fp * 4)

    return pl.pallas_call(
        _make_stft_kernel(C, TT),
        out_shape=jax.ShapeDtypeStruct((B, nT * TT, Fp), jnp.float32),
        grid_spec=pltpu.PrefetchScalarGridSpec(
            num_scalar_prefetch=0,
            grid=(B, nT),
            in_specs=[
                pl.BlockSpec((1, TT, hop), lambda b, j: (b, j, 0)),
                pl.BlockSpec((1, Cpad, hop),
                             lambda b, j: (b, (j + 1) * (TT // Cpad), 0)),
                pl.BlockSpec((C, hop, Fp), lambda b, j: (0, 0, 0)),   # resident basis
            ],
            out_specs=pl.BlockSpec((1, TT, Fp), lambda b, j: (b, j, 0)),
            scratch_shapes=[pltpu.VMEM((TT + Cpad, hop), sig.dtype)],
        ),
        compiler_params=pltpu.CompilerParams(
            dimension_semantics=("parallel", "parallel"),
            vmem_limit_bytes=vmem_limit),
        cost_estimate=pl.CostEstimate(flops=flops, transcendentals=0,
                                      bytes_accessed=bytes_accessed),
    )(sig, sig, basis)


# --------------------------------------------------------------------------
# trace-time (NumPy, float64) window + basis construction -> constant-folds
# --------------------------------------------------------------------------
def _build_basis(n_fft, win_length, window, normalized, onesided):
    if window == "hann":                      # torch.hann_window, periodic=True
        n = np.arange(win_length, dtype=np.float64)
        win = 0.5 - 0.5 * np.cos(2.0 * np.pi * n / win_length)
    elif window is None:
        win = np.ones((win_length,), dtype=np.float64)
    else:
        raise ValueError(f"{window} window is not implemented")
    pad_l = (n_fft - win_length) // 2
    win_full = np.zeros((n_fft,), dtype=np.float64)
    win_full[pad_l:pad_l + win_length] = win

    F = n_fft // 2 + 1 if onesided else n_fft
    trim_imag = bool(onesided and (n_fft % 2 == 0))   # Im(X[0]) = Im(X[N/2]) = 0
    n = np.arange(n_fft, dtype=np.int64)
    k_re = np.arange(F, dtype=np.int64)
    k_im = np.arange(1, F - 1, dtype=np.int64) if trim_imag else k_re

    def ang(k):   # integer phase reduction before the float cast
        return 2.0 * np.pi * ((n[:, None] * k[None, :]) % n_fft) / n_fft

    basis = np.concatenate([np.cos(ang(k_re)), -np.sin(ang(k_im))], axis=1)
    basis *= win_full[:, None]
    if normalized:
        basis /= np.sqrt(float(n_fft))
    return basis.astype(np.float32), F, trim_imag


# --------------------------------------------------------------------------
# forward (mirrors STFT.forward): returns (complex64 (B, T, F), olens)
# --------------------------------------------------------------------------
def stft_forward(x, ilens=None, *, n_fft=512, win_length=400, hop_length=100,
                 center=True, normalized=False, onesided=True, window="hann",
                 allow_bf16=False):
    hop = hop_length
    basis_np, F, trim_imag = _build_basis(n_fft, win_length, window,
                                          normalized, onesided)
    cols = basis_np.shape[1]
    Fp = _round_up(cols, 128)

    # hop-wise K decomposition:  n = c*hop + r,  c in [0, C)
    C = -(-n_fft // hop)
    Cpad = _round_up(max(C - 1, 1), 8)
    W = np.zeros((C * hop, Fp), dtype=np.float32)
    W[:n_fft, :cols] = basis_np
    W = W.reshape(C, hop, Fp)

    x = jnp.asarray(x, jnp.float32)
    if center:   # NOTE: reflect pad needs L > n_fft//2 (same as torch.stft)
        pad = n_fft // 2
        x = jnp.pad(x, ((0, 0), (pad, pad)), mode="reflect")
    B, Lp = x.shape
    T = (Lp - n_fft) // hop + 1

    # frame-row tile
    TT = min(512, _round_up(max(T, 8), 8))
    if B == 1 and T > 2 * Cpad:
        TT = min(TT, _round_up(-(-T // 2), Cpad))   # >= 2 grid steps (v7x megacore)
    TT = max(_round_up(TT, Cpad), Cpad)
    nT = -(-T // TT)

    # contiguous hop-reshaped signal (no (B*T, n_fft) gather is materialized)
    U = nT * TT + Cpad
    need = U * hop
    if need >= Lp:
        x = jnp.pad(x, ((0, 0), (0, need - Lp)))
    else:
        x = x[:, :need]                    # trailing samples no frame uses
    sig = x.reshape(B, U, hop)
    w = jnp.asarray(W)
    if allow_bf16:                         # optional v5e MXU path (f32 accum)
        sig = sig.astype(jnp.bfloat16)
        w = w.astype(jnp.bfloat16)

    out = _stft_pallas(sig, w, TT, Cpad, nT)        # (B, nT*TT, Fp) f32
    out = out[:, :T, :cols]
    real = out[..., :F]
    imag = out[..., F:]
    if trim_imag:                                   # re-insert zero DC/Nyquist imag
        imag = jnp.pad(imag, ((0, 0), (0, 0), (1, 1)))
    spec = (real + 1j * imag).astype(jnp.complex64)

    if ilens is not None:
        ilens = jnp.asarray(ilens)
        ilens_eff = ilens + 2 * (n_fft // 2) if center else ilens
        olens = (ilens_eff - n_fft) // hop + 1
        mask = jnp.arange(T)[None, :] < olens[:, None]
        spec = jnp.where(mask[:, :, None], spec, 0.0)
    else:
        olens = None
    return spec, olens


# --------------------------------------------------------------------------
# high-precision NumPy reference (float64)
# --------------------------------------------------------------------------
def _np_stft_ref(x, n_fft, win_length, hop, center=True):
    x = np.asarray(x, dtype=np.float64)
    if center:
        p = n_fft // 2
        x = np.pad(x, ((0, 0), (p, p)), mode="reflect")
    B, Lp = x.shape
    T = (Lp - n_fft) // hop + 1
    idx = np.arange(T)[:, None] * hop + np.arange(n_fft)[None, :]
    frames = x[:, idx]
    n = np.arange(win_length, dtype=np.float64)
    win = 0.5 - 0.5 * np.cos(2.0 * np.pi * n / win_length)
    wf = np.zeros((n_fft,), dtype=np.float64)
    pl_ = (n_fft - win_length) // 2
    wf[pl_:pl_ + win_length] = win
    F = n_fft // 2 + 1
    nn = np.arange(n_fft, dtype=np.int64)
    kk = np.arange(F, dtype=np.int64)
    ang = 2.0 * np.pi * ((nn[:, None] * kk[None, :]) % n_fft) / n_fft
    xw = frames * wf
    return xw @ np.cos(ang) - 1j * (xw @ np.sin(ang)), T, F


if __name__ == "__main__":
    key = jax.random.PRNGKey(0)
    k1, k2 = jax.random.split(key)

    # --- config 1: B=2, hop | n_fft, length masking -------------------------
    B, L = 2, 1024
    n_fft, win_length, hop = 256, 200, 64
    x = jax.random.normal(k1, (B, L), dtype=jnp.float32)
    ilens = jnp.array([1024, 800], dtype=jnp.int32)

    out, olens = stft_forward(x, ilens, n_fft=n_fft, win_length=win_length,
                              hop_length=hop)
    out = jax.block_until_ready(out)
    olens = jax.block_until_ready(olens)

    ref, T, F = _np_stft_ref(np.asarray(x), n_fft, win_length, hop)
    olens_ref = (np.asarray(ilens) + 2 * (n_fft // 2) - n_fft) // hop + 1
    mask = np.arange(T)[None, :] < olens_ref[:, None]
    ref = np.where(mask[:, :, None], ref, 0.0)

    assert out.shape == (B, T, F) and out.dtype == jnp.complex64
    assert np.allclose(np.asarray(out), ref, atol=1e-3, rtol=1e-3)
    assert np.array_equal(np.asarray(olens), olens_ref)

    # --- config 2: B=1, hop does not divide n_fft, multi-tile grid ----------
    x2 = jax.random.normal(k2, (1, 4000), dtype=jnp.float32)
    out2, _ = stft_forward(x2, None, n_fft=128, win_length=96, hop_length=48)
    out2 = jax.block_until_ready(out2)
    ref2, T2, F2 = _np_stft_ref(np.asarray(x2), 128, 96, 48)
    assert out2.shape == (1, T2, F2)
    assert np.allclose(np.asarray(out2), ref2, atol=1e-3, rtol=1e-3)

    print("KERNEL_OK")
</pallas_src>

<mosaic_0001>
module attributes {stable_mosaic.version = 11 : i64} {
  func.func @kernel(%arg0: i32, %arg1: i32, %arg2: memref<1x24x64xf32, #tpu.memory_space<vmem>>, %arg3: memref<1x8x64xf32, #tpu.memory_space<vmem>>, %arg4: memref<4x64x256xf32, #tpu.memory_space<vmem>>, %arg5: memref<1x24x256xf32, #tpu.memory_space<vmem>>, %arg6: memref<32x64xf32, #tpu.memory_space<vmem>>) attributes {dimension_semantics = [#tpu.dimension_semantics<parallel>, #tpu.dimension_semantics<parallel>], iteration_bounds = array<i64: 2, 1>, scalar_prefetch = 0 : i64, scratch_operands = 1 : i64, tpu.core_type = #tpu.core_type<tc>, window_params = [{transform_indices = @transform_0, window_bounds = array<i64: 1, 24, 64>}, {transform_indices = @transform_1, window_bounds = array<i64: 1, 8, 64>}, {pipeline_mode = #tpu.pipeline_mode<synchronous>, transform_indices = @transform_2, window_bounds = array<i64: 4, 64, 256>}, {transform_indices = @transform_3, window_bounds = array<i64: 1, 24, 256>}]} {
    %c0 = arith.constant 0 : index
    %c0_0 = arith.constant 0 : index
    %c0_1 = arith.constant 0 : index
    %0 = vector.load %arg2[%c0, %c0_0, %c0_1] : memref<1x24x64xf32, #tpu.memory_space<vmem>>, vector<1x24x64xf32>
    %1 = vector.shape_cast %0 : vector<1x24x64xf32> to vector<24x64xf32>
    %c0_2 = arith.constant 0 : index
    %c0_3 = arith.constant 0 : index
    %2 = vector.load %arg6[%c0_2, %c0_3] : memref<32x64xf32, #tpu.memory_space<vmem>>, vector<24x64xf32>
    tpu.vector_store %arg6[%c0_2, %c0_3], %1 {strides = array<i32>} : memref<32x64xf32, #tpu.memory_space<vmem>>, vector<24x64xf32>,
    %c0_4 = arith.constant 0 : index
    %c0_5 = arith.constant 0 : index
    %c0_6 = arith.constant 0 : index
    %3 = vector.load %arg3[%c0_4, %c0_5, %c0_6] : memref<1x8x64xf32, #tpu.memory_space<vmem>>, vector<1x8x64xf32>
    %4 = vector.shape_cast %3 : vector<1x8x64xf32> to vector<8x64xf32>
    %c24 = arith.constant 24 : index
    %c0_7 = arith.constant 0 : index
    %5 = vector.load %arg6[%c24, %c0_7] : memref<32x64xf32, #tpu.memory_space<vmem>>, vector<8x64xf32>
    tpu.vector_store %arg6[%c24, %c0_7], %4 {strides = array<i32>} : memref<32x64xf32, #tpu.memory_space<vmem>>, vector<8x64xf32>,
    %c0_8 = arith.constant 0 : index
    %c0_9 = arith.constant 0 : index
    %c0_10 = arith.constant 0 : index
    %6 = vector.load %arg2[%c0_8, %c0_9, %c0_10] : memref<1x24x64xf32, #tpu.memory_space<vmem>>, vector<1x24x64xf32>
    %7 = vector.shape_cast %6 : vector<1x24x64xf32> to vector<24x64xf32>
    %c0_11 = arith.constant 0 : index
    %c0_12 = arith.constant 0 : index
    %c0_13 = arith.constant 0 : index
    %8 = vector.load %arg4[%c0_11, %c0_12, %c0_13] : memref<4x64x256xf32, #tpu.memory_space<vmem>>, vector<1x64x256xf32>
    %9 = vector.shape_cast %8 : vector<1x64x256xf32> to vector<64x256xf32>
    %cst = arith.constant dense<0.000000e+00> : vector<24x256xf32>
    %10 = tpu.matmul %7, %9, %cst {dimension_numbers = #tpu.dot_dimension_numbers<[1], [0], [0], [1], [0, 0, 1, 1], [], []>} : vector<24x64xf32>, vector<64x256xf32>, vector<24x256xf32> -> vector<24x256xf32>
    %c0_14 = arith.constant 0 : index
    %c0_15 = arith.constant 0 : index
    %c0_16 = arith.constant 0 : index
    %11 = vector.load %arg5[%c0_14, %c0_15, %c0_16] : memref<1x24x256xf32, #tpu.memory_space<vmem>>, vector<1x24x256xf32>
    %12 = vector.shape_cast %11 : vector<1x24x256xf32> to vector<24x256xf32>
    %13 = vector.shape_cast %10 : vector<24x256xf32> to vector<1x24x256xf32>
    tpu.vector_store %arg5[%c0_14, %c0_15, %c0_16], %13 {strides = array<i32>} : memref<1x24x256xf32, #tpu.memory_space<vmem>>, vector<1x24x256xf32>,
    %c0_17 = arith.constant 0 : index
    %c0_18 = arith.constant 0 : index
    %c0_19 = arith.constant 0 : index
    %14 = vector.load %arg5[%c0_17, %c0_18, %c0_19] : memref<1x24x256xf32, #tpu.memory_space<vmem>>, vector<1x24x256xf32>
    %15 = vector.shape_cast %14 : vector<1x24x256xf32> to vector<24x256xf32>
    %c1 = arith.constant 1 : index
    %c0_20 = arith.constant 0 : index
    %16 = vector.load %arg6[%c1, %c0_20] : memref<32x64xf32, #tpu.memory_space<vmem>>, vector<24x64xf32>
    %c1_21 = arith.constant 1 : index
    %c0_22 = arith.constant 0 : index
    %c0_23 = arith.constant 0 : index
    %17 = vector.load %arg4[%c1_21, %c0_22, %c0_23] : memref<4x64x256xf32, #tpu.memory_space<vmem>>, vector<1x64x256xf32>
    %18 = vector.shape_cast %17 : vector<1x64x256xf32> to vector<64x256xf32>
    %cst_24 = arith.constant dense<0.000000e+00> : vector<24x256xf32>
    %19 = tpu.matmul %16, %18, %cst_24 {dimension_numbers = #tpu.dot_dimension_numbers<[1], [0], [0], [1], [0, 0, 1, 1], [], []>} : vector<24x64xf32>, vector<64x256xf32>, vector<24x256xf32> -> vector<24x256xf32>
    %20 = arith.addf %15, %19 : vector<24x256xf32>
    %c0_25 = arith.constant 0 : index
    %c0_26 = arith.constant 0 : index
    %c0_27 = arith.constant 0 : index
    %21 = vector.load %arg5[%c0_25, %c0_26, %c0_27] : memref<1x24x256xf32, #tpu.memory_space<vmem>>, vector<1x24x256xf32>
    %22 = vector.shape_cast %21 : vector<1x24x256xf32> to vector<24x256xf32>
    %23 = vector.shape_cast %20 : vector<24x256xf32> to vector<1x24x256xf32>
    tpu.vector_store %arg5[%c0_25, %c0_26, %c0_27], %23 {strides = array<i32>} : memref<1x24x256xf32, #tpu.memory_space<vmem>>, vector<1x24x256xf32>,
    %c0_28 = arith.constant 0 : index
    %c0_29 = arith.constant 0 : index
    %c0_30 = arith.constant 0 : index
    %24 = vector.load %arg5[%c0_28, %c0_29, %c0_30] : memref<1x24x256xf32, #tpu.memory_space<vmem>>, vector<1x24x256xf32>
    %25 = vector.shape_cast %24 : vector<1x24x256xf32> to vector<24x256xf32>
    %c2 = arith.constant 2 : index
    %c0_31 = arith.constant 0 : index
    %26 = vector.load %arg6[%c2, %c0_31] : memref<32x64xf32, #tpu.memory_space<vmem>>, vector<24x64xf32>
    %c2_32 = arith.constant 2 : index
    %c0_33 = arith.constant 0 : index
    %c0_34 = arith.constant 0 : index
    %27 = vector.load %arg4[%c2_32, %c0_33, %c0_34] : memref<4x64x256xf32, #tpu.memory_space<vmem>>, vector<1x64x256xf32>
    %28 = vector.shape_cast %27 : vector<1x64x256xf32> to vector<64x256xf32>
    %cst_35 = arith.constant dense<0.000000e+00> : vector<24x256xf32>
    %29 = tpu.matmul %26, %28, %cst_35 {dimension_numbers = #tpu.dot_dimension_numbers<[1], [0], [0], [1], [0, 0, 1, 1], [], []>} : vector<24x64xf32>, vector<64x256xf32>, vector<24x256xf32> -> vector<24x256xf32>
    %30 = arith.addf %25, %29 : vector<24x256xf32>
    %c0_36 = arith.constant 0 : index
    %c0_37 = arith.constant 0 : index
    %c0_38 = arith.constant 0 : index
    %31 = vector.load %arg5[%c0_36, %c0_37, %c0_38] : memref<1x24x256xf32, #tpu.memory_space<vmem>>, vector<1x24x256xf32>
    %32 = vector.shape_cast %31 : vector<1x24x256xf32> to vector<24x256xf32>
    %33 = vector.shape_cast %30 : vector<24x256xf32> to vector<1x24x256xf32>
    tpu.vector_store %arg5[%c0_36, %c0_37, %c0_38], %33 {strides = array<i32>} : memref<1x24x256xf32, #tpu.memory_space<vmem>>, vector<1x24x256xf32>,
    %c0_39 = arith.constant 0 : index
    %c0_40 = arith.constant 0 : index
    %c0_41 = arith.constant 0 : index
    %34 = vector.load %arg5[%c0_39, %c0_40, %c0_41] : memref<1x24x256xf32, #tpu.memory_space<vmem>>, vector<1x24x256xf32>
    %35 = vector.shape_cast %34 : vector<1x24x256xf32> to vector<24x256xf32>
    %c3 = arith.constant 3 : index
    %c0_42 = arith.constant 0 : index
    %36 = vector.load %arg6[%c3, %c0_42] : memref<32x64xf32, #tpu.memory_space<vmem>>, vector<24x64xf32>
    %c3_43 = arith.constant 3 : index
    %c0_44 = arith.constant 0 : index
    %c0_45 = arith.constant 0 : index
    %37 = vector.load %arg4[%c3_43, %c0_44, %c0_45] : memref<4x64x256xf32, #tpu.memory_space<vmem>>, vector<1x64x256xf32>
    %38 = vector.shape_cast %37 : vector<1x64x256xf32> to vector<64x256xf32>
    %cst_46 = arith.constant dense<0.000000e+00> : vector<24x256xf32>
    %39 = tpu.matmul %36, %38, %cst_46 {dimension_numbers = #tpu.dot_dimension_numbers<[1], [0], [0], [1], [0, 0, 1, 1], [], []>} : vector<24x64xf32>, vector<64x256xf32>, vector<24x256xf32> -> vector<24x256xf32>
    %40 = arith.addf %35, %39 : vector<24x256xf32>
    %c0_47 = arith.constant 0 : index
    %c0_48 = arith.constant 0 : index
    %c0_49 = arith.constant 0 : index
    %41 = vector.load %arg5[%c0_47, %c0_48, %c0_49] : memref<1x24x256xf32, #tpu.memory_space<vmem>>, vector<1x24x256xf32>
    %42 = vector.shape_cast %41 : vector<1x24x256xf32> to vector<24x256xf32>
    %43 = vector.shape_cast %40 : vector<24x256xf32> to vector<1x24x256xf32>
    tpu.vector_store %arg5[%c0_47, %c0_48, %c0_49], %43 {strides = array<i32>} : memref<1x24x256xf32, #tpu.memory_space<vmem>>, vector<1x24x256xf32>,
    return
  }
  func.func @transform_0(%arg0: i32, %arg1: i32) -> (i32, i32, i32) {
    %c0_i32 = arith.constant 0 : i32
    %c0_i32_0 = arith.constant 0 : i32
    return %arg0, %arg1, %c0_i32 : i32, i32, i32
  }
  func.func @transform_1(%arg0: i32, %arg1: i32) -> (i32, i32, i32) {
    %c1_i32 = arith.constant 1 : i32
    %0 = arith.addi %arg1, %c1_i32 : i32
    %c3_i32 = arith.constant 3 : i32
    %1 = arith.muli %0, %c3_i32 : i32
    %c0_i32 = arith.constant 0 : i32
    %c0_i32_0 = arith.constant 0 : i32
    return %arg0, %1, %c0_i32 : i32, i32, i32
  }
  func.func @transform_2(%arg0: i32, %arg1: i32) -> (i32, i32, i32) {
    %c0_i32 = arith.constant 0 : i32
    %c0_i32_0 = arith.constant 0 : i32
    %c0_i32_1 = arith.constant 0 : i32
    %c0_i32_2 = arith.constant 0 : i32
    return %c0_i32, %c0_i32_0, %c0_i32_1 : i32, i32, i32
  }
  func.func @transform_3(%arg0: i32, %arg1: i32) -> (i32, i32, i32) {
    %c0_i32 = arith.constant 0 : i32
    %c0_i32_0 = arith.constant 0 : i32
    return %arg0, %arg1, %c0_i32 : i32, i32, i32
  }
}

</mosaic_0001>

<llo_original>
// kernel: tpu_custom_call.1
$region0: #{tpu_custom_call.1}
  #allocation0 [shape = 'u32[]', space=smem, size = 0x4, offset = 0x4, fixed_abs, tag = 'smem constant byte address 0x4 - core index']
  #allocation1 [shape = 'u32[144,128]{1,0:T(1,128)}', space=vmem, size = 0x12000, scoped, tag = 'internal scratch']
  #allocation2 [shape = 'f32[32,64]{1,0:T(8,128)}', space=vmem, size = 0x4000, scoped, tag = 'scratch operand']
  %s0 = inlined_call_operand.hbm [shape: f32[2,32,64], index: 0, kind: input, shape index: {}]
  %s1 = inlined_call_operand.hbm [shape: f32[2,32,64], index: 1, kind: input, shape index: {}]
  %s2 = inlined_call_operand.hbm [shape: f32[4,64,256], index: 2, kind: input, shape index: {}]
  %s3 = inlined_call_operand.hbm [shape: f32[2,24,256], index: 3, kind: output, shape index: {}]
  %s4 = sld [smem:[#allocation0]]
  $region57: #{tpu_custom_call.1} parent=0
    _
  %s6 = ssub.s32 1, %s4
  %s7 = scalar_select 0, %s6, %s4
  $region1: #{tpu_custom_call.1} parent=0
    #allocation3 [shape = 'u8[24576]{0}', space=vmem, size = 0x6000, scoped, tag = 'input window, operand 0']
    #allocation4 [shape = 's32[2]{0}', space=sflag, size = 0x8, scoped, tag = 'scoped memory for tpu_custom_call.1']
    #allocation5 [shape = 's32[2]{0}', space=sflag, size = 0x8, scoped, tag = 'scoped memory for tpu_custom_call.1']
    #allocation6 [shape = 'u8[8192]{0}', space=vmem, size = 0x2000, scoped, tag = 'input window, operand 1']
    #allocation7 [shape = 's32[2]{0}', space=sflag, size = 0x8, scoped, tag = 'scoped memory for tpu_custom_call.1']
    #allocation8 [shape = 'u8[262144]{0}', space=vmem, size = 0x40000, scoped, tag = 'input window, operand 2, single buffered']
    #allocation9 [shape = 'u8[49152]{0}', space=vmem, size = 0xc000, scoped, tag = 'output window, operand 0']
    %8 = vsyncpa [#allocation4], 0
    %s9 = scalar_lea.sflag [#allocation4], 1
    %10 = vsyncpa %s9, 0
    %11 = vsyncpa [#allocation7], 0
    %s12 = scalar_lea.sflag [#allocation7], 1
    %13 = vsyncpa %s12, 0
    %14 = vsyncpa [#allocation5], 0
    %s15 = scalar_lea.sflag [#allocation5], 1
    %16 = vsyncpa %s15, 0
    loop: start=0, step=1, limit=4
    $region2: #{tpu_custom_call.1} parent=1 // loop_pre_header
      _
    $region3: #{tpu_custom_call.1} parent=1 // loop_header
      %s18 = sphi 0, %s22
      %p19 = scmp.ge.s32.totalorder %s18, 4
      %s25 = sphi 0, %s37
      %s26 = sphi 0, %s33
      %s27 = sphi 0, %s25
      %s28 = sphi 0, %s26
      %s29 = sphi 0, %s27
      %s30 = sphi 0, %s28
      %s42 = sphi 0, %s44
      %s45 = sphi 0, %s42
      %s46 = sphi 0, %s45
      %s62 = sphi 0, %s46
      %s74 = sphi 0, %s76
      %s77 = sphi 0, %s74
      %s78 = sphi 0, %s77
      %s94 = sphi 0, %s78
      %s98 = sphi 0, %s98
      %s100 = sphi 0, %s98
      %s101 = sphi 0, %s100
      %s115 = sphi 0, %s101
      %s123 = sphi 0, %s125
      %s126 = sphi 0, %s123
      %s127 = sphi 0, %s126
      %s143 = sphi 0, %s127
    $region4: #{tpu_custom_call.1} parent=1 // loop_header_branch
      %21 = sbr.rel (%p19) target = $region8
    $region5: #{tpu_custom_call.1} parent=1 // loop_body
      %s23 = ssub.s32 %s18, 1
      %s24 = ssub.s32 %s18, 2
      %s31 = sadd.s32 1, %s26
      %p32 = scmp.ge.s32.totalorder %s31, 1
      %s33 = scalar_select %p32, 0, %s31
      %s34 = sadd.s32 1, %s25
      %s35 = scalar_select %p32, %s34, %s25
      %p36 = scmp.ge.s32.totalorder %s35, 2
      %s37 = scalar_select %p36, 0, %s35
      %s38 = ssub.s32 %s25, %s37
      %s39 = ssub.s32 %s26, %s33
      %s40 = sor.u32 %s38, %s39
      %p41 = scmp.eq.s32.totalorder %s40, 0
      %s43 = sadd.s32 %s42, 1
      %s44 = scalar_select %p41, %s42, %s43
      %p47 = pneg %p41
      %p48 = scmp.eq.s32.totalorder %s18, 1
      %p49 = por %p47, %p48
      %p50 = scmp.ne.s32.totalorder %s42, %s45
      %p51 = scmp.eq.s32.totalorder %s18, 0
      %p52 = por %p50, %p51
      %p53 = scmp.ne.s32.totalorder %s42, %s45
      %p54 = scmp.eq.s32.totalorder %s23, 1
      %p55 = por %p53, %p54
      %p56 = scmp.ne.s32.totalorder %s45, %s46
      %p57 = scmp.eq.s32.totalorder %s23, 0
      %p58 = por %p56, %p57
      %p59 = scmp.ne.s32.totalorder %s45, %s46
      %p60 = scmp.eq.s32.totalorder %s24, 1
      %p61 = por %p59, %p60
      %p63 = scmp.ne.s32.totalorder %s46, %s62
      %p64 = scmp.eq.s32.totalorder %s24, 0
      %p65 = por %p63, %p64
      %s66 = sadd.s32 %s26, 1
      %s67 = smul.u32 %s66, 3
      %s68 = sadd.s32 %s33, 1
      %s69 = smul.u32 %s68, 3
      %s70 = ssub.s32 %s25, %s37
      %s71 = ssub.s32 %s67, %s69
      %s72 = sor.u32 %s70, %s71
      %p73 = scmp.eq.s32.totalorder %s72, 0
      %s75 = sadd.s32 %s74, 1
      %s76 = scalar_select %p73, %s74, %s75
      %p79 = pneg %p73
      %p80 = scmp.eq.s32.totalorder %s18, 1
      %p81 = por %p79, %p80
      %p82 = scmp.ne.s32.totalorder %s74, %s77
      %p83 = scmp.eq.s32.totalorder %s18, 0
      %p84 = por %p82, %p83
      %p85 = scmp.ne.s32.totalorder %s74, %s77
      %p86 = scmp.eq.s32.totalorder %s23, 1
      %p87 = por %p85, %p86
      %p88 = scmp.ne.s32.totalorder %s77, %s78
      %p89 = scmp.eq.s32.totalorder %s23, 0
      %p90 = por %p88, %p89
      %p91 = scmp.ne.s32.totalorder %s77, %s78
      %p92 = scmp.eq.s32.totalorder %s24, 1
      %p93 = por %p91, %p92
      %p95 = scmp.ne.s32.totalorder %s78, %s94
      %p96 = scmp.eq.s32.totalorder %s24, 0
      %p97 = por %p95, %p96
      %s99 = sadd.s32 %s98, 1
      %p102 = scmp.eq.s32.totalorder %s18, 1
      %p103 = scmp.ne.s32.totalorder %s98, %s100
      %p104 = scmp.eq.s32.totalorder %s18, 0
      %p105 = por %p103, %p104
      %p106 = scmp.ne.s32.totalorder %s98, %s100
      %p107 = scmp.eq.s32.totalorder %s23, 1
      %p108 = por %p106, %p107
      %p109 = scmp.ne.s32.totalorder %s100, %s101
      %p110 = scmp.eq.s32.totalorder %s23, 0
      %p111 = por %p109, %p110
      %p112 = scmp.ne.s32.totalorder %s100, %s101
      %p113 = scmp.eq.s32.totalorder %s24, 1
      %p114 = por %p112, %p113
      %p116 = scmp.ne.s32.totalorder %s101, %s115
      %p117 = scmp.eq.s32.totalorder %s24, 0
      %p118 = por %p116, %p117
      %s119 = ssub.s32 %s25, %s37
      %s120 = ssub.s32 %s26, %s33
      %s121 = sor.u32 %s119, %s120
      %p122 = scmp.eq.s32.totalorder %s121, 0
      %s124 = sadd.s32 %s123, 1
      %s125 = scalar_select %p122, %s123, %s124
      %p128 = pneg %p122
      %p129 = scmp.eq.s32.totalorder %s18, 1
      %p130 = por %p128, %p129
      %p131 = scmp.ne.s32.totalorder %s123, %s126
      %p132 = scmp.eq.s32.totalorder %s18, 0
      %p133 = por %p131, %p132
      %p134 = scmp.ne.s32.totalorder %s123, %s126
      %p135 = scmp.eq.s32.totalorder %s23, 1
      %p136 = por %p134, %p135
      %p137 = scmp.ne.s32.totalorder %s126, %s127
      %p138 = scmp.eq.s32.totalorder %s23, 0
      %p139 = por %p137, %p138
      %p140 = scmp.ne.s32.totalorder %s126, %s127
      %p141 = scmp.eq.s32.totalorder %s24, 1
      %p142 = por %p140, %p141
      %p144 = scmp.ne.s32.totalorder %s127, %s143
      %p145 = scmp.eq.s32.totalorder %s24, 0
      %p146 = por %p144, %p145
      %p147 = scmp.le.s32.totalorder 1, %s18
      %p148 = scmp.lt.s32.totalorder %s18, 3
      %p149 = pnand %p147, %p148
      %p150 = pneg %p149
      // Predicated region
      $region9: #{tpu_custom_call.1} parent=5 // pred_check
        _
      $region10: #{tpu_custom_call.1} parent=5 // pred_check_branch
        %152 = sbr.rel (%p149) target = $region12
      $region11: #{tpu_custom_call.1} parent=5 // pred_region
        %s153 = ssub.s32 %s18, 1
        // Predicated region
        $region13: #{tpu_custom_call.1} parent=11 // pred_check
          %p154 = pneg %p111
        $region14: #{tpu_custom_call.1} parent=11 // pred_check_branch
          %156 = sbr.rel (%p154) target = $region16
        $region15: #{tpu_custom_call.1} parent=11 // pred_region
          %s158 = ssub.s32 8192, 8192
          %159 = vsyncadd [#allocation7], %s158
          %s160 = sshll.u32 [#allocation8], 4
          %s161 = int_to_ptr.vmem [resolvable:$true] %s160
          %166 = dma.hbm_to_vmem [thread:$0]  %s2, 8192, %s161, [#allocation7], 256, 256, 16
        $region16: #{tpu_custom_call.1} parent=11 // pred_fallthru
          _
      $region12: #{tpu_custom_call.1} parent=5 // pred_fallthru
        _
      %p167 = scmp.lt.s32.totalorder %s18, 2
      // Predicated region
      $region17: #{tpu_custom_call.1} parent=5 // pred_check
        %p168 = pneg %p167
      $region18: #{tpu_custom_call.1} parent=5 // pred_check_branch
        %170 = sbr.rel (%p168) target = $region20
      $region19: #{tpu_custom_call.1} parent=5 // pred_region
        // Predicated region
        $region21: #{tpu_custom_call.1} parent=19 // pred_check
          %p171 = pneg %p52
        $region22: #{tpu_custom_call.1} parent=19 // pred_check_branch
          %173 = sbr.rel (%p171) target = $region24
        $region23: #{tpu_custom_call.1} parent=19 // pred_region
          %s174 = sand.u32 %s42, 1
          %s175 = scalar_lea.sflag [#allocation4], %s174
          %s176 = sand.u32 %s42, 1
          %s177 = smul.addr %s176, 24
          %s178 = scalar_lea.vmem [#allocation3], %s177
          %s179 = smul.u32 3, %s26
          %s180 = ssub.s32 4, %s179
          %p181 = scmp.lt.s32.totalorder %s180, 3
          %s182 = scalar_select %p181, %s180, 3
          %s183 = smul.u32 128, %s182
          %s185 = ssub.s32 384, %s183
          %186 = vsyncadd %s175, %s185
          %p187 = scmp.ne.s32.totalorder 0, %s183
          %s188 = smul.addr %s25, 4
          %s189 = sadd.s32 %s179, %s188
          %s190 = smul.addr %s189, 128
          %s191 = scalar_lea.hbm %s0, %s190
          %s192 = smul.u32 8, %s182
          %s193 = sshll.u32 %s178, 4
          %s194 = int_to_ptr.vmem [resolvable:$true] %s193
          %s195 = sshll.u32 %s192, 4
          %199 = dma.hbm_to_vmem [thread:$0]  (%p187), %s191, %s195, %s194, %s175, 128, 128, 8
        $region24: #{tpu_custom_call.1} parent=19 // pred_fallthru
          _
        // Predicated region
        $region25: #{tpu_custom_call.1} parent=19 // pred_check
          %p200 = pneg %p84
        $region26: #{tpu_custom_call.1} parent=19 // pred_check_branch
          %202 = sbr.rel (%p200) target = $region28
        $region27: #{tpu_custom_call.1} parent=19 // pred_region
          %s203 = sand.u32 %s18, 1
          %s204 = scalar_lea.sflag [#allocation7], %s203
          %s205 = sand.u32 %s74, 1
          %s206 = smul.addr %s205, 8
          %s207 = scalar_lea.vmem [#allocation6], %s206
          %s208 = sadd.s32 %s26, 1
          %s209 = smul.u32 %s208, 3
          %s211 = ssub.s32 128, 128
          %212 = vsyncadd %s204, %s211
          %s213 = smul.addr %s25, 4
          %s214 = sadd.s32 %s209, %s213
          %s215 = smul.addr %s214, 128
          %s216 = scalar_lea.hbm %s1, %s215
          %s218 = sshll.u32 %s207, 4
          %s219 = int_to_ptr.vmem [resolvable:$true] %s218
          %221 = dma.hbm_to_vmem [thread:$0]  %s216, 128, %s219, %s204
        $region28: #{tpu_custom_call.1} parent=19 // pred_fallthru
          _
      $region20: #{tpu_custom_call.1} parent=5 // pred_fallthru
        _
      %p222 = scmp.le.s32.totalorder 1, %s18
      %p223 = scmp.lt.s32.totalorder %s18, 3
      %p224 = pnand %p222, %p223
      %p225 = pneg %p224
      // Predicated region
      $region29: #{tpu_custom_call.1} parent=5 // pred_check
        _
      $region30: #{tpu_custom_call.1} parent=5 // pred_check_branch
        %227 = sbr.rel (%p224) target = $region32
      $region31: #{tpu_custom_call.1} parent=5 // pred_region
        %s228 = ssub.s32 %s18, 1
        %s229 = sand.u32 %s45, 1
        %s230 = scalar_lea.sflag [#allocation4], %s229
        %s231 = sand.u32 %s45, 1
        %s232 = smul.addr %s231, 24
        %s233 = scalar_lea.vmem [#allocation3], %s232
        // Predicated region
        $region33: #{tpu_custom_call.1} parent=31 // pred_check
          %p234 = pneg %p58
        $region34: #{tpu_custom_call.1} parent=31 // pred_check_branch
          %236 = sbr.rel (%p234) target = $region36
        $region35: #{tpu_custom_call.1} parent=31 // pred_region
          %237 = dma.done %s230, 384
        $region36: #{tpu_custom_call.1} parent=31 // pred_fallthru
          _
        %s238 = sand.u32 %s23, 1
        %s239 = scalar_lea.sflag [#allocation7], %s238
        %s240 = sand.u32 %s77, 1
        %s241 = smul.addr %s240, 8
        %s242 = scalar_lea.vmem [#allocation6], %s241
        // Predicated region
        $region37: #{tpu_custom_call.1} parent=31 // pred_check
          %p243 = pneg %p90
        $region38: #{tpu_custom_call.1} parent=31 // pred_check_branch
          %245 = sbr.rel (%p243) target = $region40
        $region39: #{tpu_custom_call.1} parent=31 // pred_region
          %246 = dma.done %s239, 128
        $region40: #{tpu_custom_call.1} parent=31 // pred_fallthru
          _
        // Predicated region
        $region41: #{tpu_custom_call.1} parent=31 // pred_check
          %p247 = pneg %p111
        $region42: #{tpu_custom_call.1} parent=31 // pred_check_branch
          %249 = sbr.rel (%p247) target = $region44
        $region43: #{tpu_custom_call.1} parent=31 // pred_region
          %250 = dma.done [#allocation7], 8192
        $region44: #{tpu_custom_call.1} parent=31 // pred_fallthru
          _
        %s251 = sand.u32 %s45, 1
        %s252 = scalar_lea.sflag [#allocation4], %s251
        %s253 = sand.u32 %s45, 1
        %s254 = smul.addr %s253, 24
        %s255 = scalar_lea.vmem [#allocation3], %s254
        %p256 = pneg %p58
        %p257 = pneg %p55
        %s258 = sand.u32 %s23, 1
        %s259 = scalar_lea.sflag [#allocation7], %s258
        %s260 = sand.u32 %s77, 1
        %s261 = smul.addr %s260, 8
        %s262 = scalar_lea.vmem [#allocation6], %s261
        %p263 = pneg %p90
        %p264 = pneg %p87
        %p265 = pneg %p111
        %p266 = pneg %p108
        %p267 = pneg %p139
        %p268 = pneg %p136
        %s269 = sand.u32 %s126, 1
        %s270 = scalar_lea.sflag [#allocation5], %s269
        %s271 = sand.u32 %s126, 1
        %s272 = smul.addr %s271, 48
        %s273 = scalar_lea.vmem [#allocation9], %s272
        %s274 = smul.u32 3, %s28
        %s275 = ssub.s32 4, %s274
        %p276 = scmp.lt.s32.totalorder %s275, 3
        %s277 = scalar_select %p276, %s275, 3
        %s278 = smul.u32 128, %s277
        %s279 = sadd.s32 %s28, 1
        %s280 = smul.u32 %s279, 3
        %s281 = smul.u32 3, %s28
        %v282 = vld [vmem:[%s233] sm:$0xff]
        %v283 = vld [vmem:[%s233 + $0x8] sm:$0xff]
        %v284 = vld [vmem:[%s233 + $0x10] sm:$0xff]
        %vm285 = vcmask 523264
        %286 = vst.msk [vmem:[#allocation2] sm:$0xff] %vm285, %v282
        %287 = vst.msk [vmem:[#allocation2 + $0x8] sm:$0xff] %vm285, %v283
        %288 = vst.msk [vmem:[#allocation2 + $0x10] sm:$0xff] %vm285, %v284
        %v289 = vld [vmem:[%s242] sm:$0xff]
        %290 = vst.msk [vmem:[#allocation2 + $0x18] sm:$0xff] %vm285, %v289
        %v291 = vld [vmem:[%s233] sm:$0xff]
        %v292 = vld [vmem:[%s233 + $0x8] sm:$0xff]
        %v293 = vld [vmem:[%s233 + $0x10] sm:$0xff]
        %v294 = vld [vmem:[#allocation8] sm:$0xff]
        %v295 = vld [vmem:[#allocation8 + $0x8] sm:$0xff]
        %v296 = vld [vmem:[#allocation8 + $0x10] sm:$0xff]
        %v297 = vld [vmem:[#allocation8 + $0x18] sm:$0xff]
        %v298 = vld [vmem:[#allocation8 + $0x20] sm:$0xff]
        %v299 = vld [vmem:[#allocation8 + $0x28] sm:$0xff]
        %v300 = vld [vmem:[#allocation8 + $0x30] sm:$0xff]
        %v301 = vld [vmem:[#allocation8 + $0x38] sm:$0xff]
        %v302 = vld [vmem:[#allocation8 + $0x40] sm:$0xff]
        %v303 = vld [vmem:[#allocation8 + $0x48] sm:$0xff]
        %v304 = vld [vmem:[#allocation8 + $0x50] sm:$0xff]
        %v305 = vld [vmem:[#allocation8 + $0x58] sm:$0xff]
        %v306 = vld [vmem:[#allocation8 + $0x60] sm:$0xff]
        %v307 = vld [vmem:[#allocation8 + $0x68] sm:$0xff]
        %v308 = vld [vmem:[#allocation8 + $0x70] sm:$0xff]
        %v309 = vld [vmem:[#allocation8 + $0x78] sm:$0xff]
        %v311 = vsel %vm285, %v291, 0
        %v314 = vsel %vm285, %v292, 0
        %v317 = vsel %vm285, %v293, 0
        %319 = vmatprep.subr.mxu0 0.0
        %320 = vmatpush1.msra.mxu0 0.0
        %321 = vmatprep.subr.mxu0 0.0
        %322 = vmatpush1.msra.mxu0 0.0
        %323 = vmatprep.subr.mxu0 0.0
        %324 = vmatpush1.msra.mxu0 0.0
        %325 = vmatprep.subr.mxu0 0.0
        %326 = vmatpush1.msra.mxu0 0.0
        %327 = vmatprep.subr.mxu0 0.0
        %328 = vmatpush1.msra.mxu0 0.0
        %329 = vmatprep.subr.mxu0 0.0
        %330 = vmatpush1.msra.mxu0 0.0
        %331 = vmatprep.subr.mxu0 0.0
        %332 = vmatpush1.msra.mxu0 0.0
        %333 = vmatprep.subr.mxu0 0.0
        %334 = vmatpush1.msra.mxu0 0.0
        %335 = vmatprep.subr.mxu0 %v309
        %336 = vmatpush1.msra.mxu0 %v308
        %337 = vmatprep.subr.mxu0 %v307
        %338 = vmatpush1.msra.mxu0 %v306
        %339 = vmatprep.subr.mxu0 %v305
        %340 = vmatpush1.msra.mxu0 %v304
        %341 = vmatprep.subr.mxu0 %v303
        %342 = vmatpush1.msra.mxu0 %v302
        %343 = vmatprep.subr.mxu0 %v301
        %344 = vmatpush1.msra.mxu0 %v300
        %345 = vmatprep.subr.mxu0 %v299
        %346 = vmatpush1.msra.mxu0 %v298
        %347 = vmatprep.subr.mxu0 %v297
        %348 = vmatpush1.msra.mxu0 %v296
        %349 = vmatprep.subr.mxu0 %v295
        %350 = vmatpush1.msra.mxu0 %v294
        %351 = vmatprep.subr.mxu0 0.0
        %352 = vmatpush2.msra.mxu0 0.0
        %353 = vmatprep.subr.mxu0 0.0
        %354 = vmatpush2.msra.mxu0 0.0
        %355 = vmatprep.subr.mxu0 0.0
        %356 = vmatpush2.msra.mxu0 0.0
        %357 = vmatprep.subr.mxu0 0.0
        %358 = vmatpush2.msra.mxu0 0.0
        %359 = vmatprep.subr.mxu0 0.0
        %360 = vmatpush2.msra.mxu0 0.0
        %361 = vmatprep.subr.mxu0 0.0
        %362 = vmatpush2.msra.mxu0 0.0
        %363 = vmatprep.subr.mxu0 0.0
        %364 = vmatpush2.msra.mxu0 0.0
        %365 = vmatprep.subr.mxu0 0.0
        %366 = vmatpush2.msra.mxu0 0.0
        %367 = vmatprep.subr.mxu0 0.0
        %368 = vmatpush2.msra.mxu0 0.0
        %369 = vmatprep.subr.mxu0 0.0
        %370 = vmatpush2.msra.mxu0 0.0
        %371 = vmatprep.subr.mxu0 0.0
        %372 = vmatpush2.msra.mxu0 0.0
        %373 = vmatprep.subr.mxu0 0.0
        %374 = vmatpush2.msra.mxu0 0.0
        %375 = vmatprep.subr.mxu0 0.0
        %376 = vmatpush2.msra.mxu0 0.0
        %377 = vmatprep.subr.mxu0 0.0
        %378 = vmatpush2.msra.mxu0 0.0
        %379 = vmatprep.subr.mxu0 0.0
        %380 = vmatpush2.msra.mxu0 0.0
        %381 = vmatprep.subr.mxu0 0.0
        %382 = vmatpush2.msra.mxu0 0.0
        %383 = vmatprep.mubr.f32.mxu0 0.0
        %384 = vmatmul.mubr.f32.gmra.mxu0 %v311
        %v385 = vpop.f32.mrf.mxu0
        %v386 = vadd.f32 0.0, %v385
        %v387 = vpop.f32.mrf.mxu0
        %v388 = vadd.f32 0.0, %v387
        %389 = vmatprep.mubr.f32.mxu0 0.0
        %390 = vmatmul.mubr.f32.gmra.mxu0 %v314
        %v391 = vpop.f32.mrf.mxu0
        %v392 = vadd.f32 0.0, %v391
        %v393 = vpop.f32.mrf.mxu0
        %v394 = vadd.f32 0.0, %v393
        %395 = vmatprep.mubr.f32.mxu0 0.0
        %396 = vmatmul.mubr.f32.gmra.mxu0 %v317
        %v397 = vpop.f32.mrf.mxu0
        %v398 = vadd.f32 0.0, %v397
        %v399 = vpop.f32.mrf.mxu0
        %v400 = vadd.f32 0.0, %v399
        %401 = vdwg.mxu0
        %402 = vst [vmem:[%s273] sm:$0xff] %v386
        %403 = vst [vmem:[%s273 + $0x8] sm:$0xff] %v388
        %404 = vst [vmem:[%s273 + $0x10] sm:$0xff] %v392
        %405 = vst [vmem:[%s273 + $0x18] sm:$0xff] %v394
        %406 = vst [vmem:[%s273 + $0x20] sm:$0xff] %v398
        %407 = vst [vmem:[%s273 + $0x28] sm:$0xff] %v400
        %v408 = vld [vmem:[%s273] sm:$0xff]
        %v409 = vld [vmem:[%s273 + $0x8] sm:$0xff]
        %v410 = vld [vmem:[%s273 + $0x10] sm:$0xff]
        %v411 = vld [vmem:[%s273 + $0x18] sm:$0xff]
        %v412 = vld [vmem:[%s273 + $0x20] sm:$0xff]
        %v413 = vld [vmem:[%s273 + $0x28] sm:$0xff]
        %v414 = vld [vmem:[#allocation2 + $0x1] sm:$0xff]
        %v415 = vld [vmem:[#allocation2 + $0x9] sm:$0xff]
        %v416 = vld [vmem:[#allocation2 + $0x11] sm:$0xff]
        %s417 = scalar_lea.vmem [#allocation8], 128
        %v418 = vld [vmem:[%s417] sm:$0xff]
        %v419 = vld [vmem:[%s417 + $0x8] sm:$0xff]
        %v420 = vld [vmem:[%s417 + $0x10] sm:$0xff]
        %v421 = vld [vmem:[%s417 + $0x18] sm:$0xff]
        %v422 = vld [vmem:[%s417 + $0x20] sm:$0xff]
        %v423 = vld [vmem:[%s417 + $0x28] sm:$0xff]
        %v424 = vld [vmem:[%s417 + $0x30] sm:$0xff]
        %v425 = vld [vmem:[%s417 + $0x38] sm:$0xff]
        %v426 = vld [vmem:[%s417 + $0x40] sm:$0xff]
        %v427 = vld [vmem:[%s417 + $0x48] sm:$0xff]
        %v428 = vld [vmem:[%s417 + $0x50] sm:$0xff]
        %v429 = vld [vmem:[%s417 + $0x58] sm:$0xff]
        %v430 = vld [vmem:[%s417 + $0x60] sm:$0xff]
        %v431 = vld [vmem:[%s417 + $0x68] sm:$0xff]
        %v432 = vld [vmem:[%s417 + $0x70] sm:$0xff]
        %v433 = vld [vmem:[%s417 + $0x78] sm:$0xff]
        %v435 = vsel %vm285, %v414, 0
        %v438 = vsel %vm285, %v415, 0
        %v441 = vsel %vm285, %v416, 0
        %443 = vmatprep.subr.mxu0 0.0
        %444 = vmatpush1.msra.mxu0 0.0
        %445 = vmatprep.subr.mxu0 0.0
        %446 = vmatpush1.msra.mxu0 0.0
        %447 = vmatprep.subr.mxu0 0.0
        %448 = vmatpush1.msra.mxu0 0.0
        %449 = vmatprep.subr.mxu0 0.0
        %450 = vmatpush1.msra.mxu0 0.0
        %451 = vmatprep.subr.mxu0 0.0
        %452 = vmatpush1.msra.mxu0 0.0
        %453 = vmatprep.subr.mxu0 0.0
        %454 = vmatpush1.msra.mxu0 0.0
        %455 = vmatprep.subr.mxu0 0.0
        %456 = vmatpush1.msra.mxu0 0.0
        %457 = vmatprep.subr.mxu0 0.0
        %458 = vmatpush1.msra.mxu0 0.0
        %459 = vmatprep.subr.mxu0 %v433
        %460 = vmatpush1.msra.mxu0 %v432
        %461 = vmatprep.subr.mxu0 %v431
        %462 = vmatpush1.msra.mxu0 %v430
        %463 = vmatprep.subr.mxu0 %v429
        %464 = vmatpush1.msra.mxu0 %v428
        %465 = vmatprep.subr.mxu0 %v427
        %466 = vmatpush1.msra.mxu0 %v426
        %467 = vmatprep.subr.mxu0 %v425
        %468 = vmatpush1.msra.mxu0 %v424
        %469 = vmatprep.subr.mxu0 %v423
        %470 = vmatpush1.msra.mxu0 %v422
        %471 = vmatprep.subr.mxu0 %v421
        %472 = vmatpush1.msra.mxu0 %v420
        %473 = vmatprep.subr.mxu0 %v419
        %474 = vmatpush1.msra.mxu0 %v418
        %475 = vmatprep.subr.mxu0 0.0
        %476 = vmatpush2.msra.mxu0 0.0
        %477 = vmatprep.subr.mxu0 0.0
        %478 = vmatpush2.msra.mxu0 0.0
        %479 = vmatprep.subr.mxu0 0.0
        %480 = vmatpush2.msra.mxu0 0.0
        %481 = vmatprep.subr.mxu0 0.0
        %482 = vmatpush2.msra.mxu0 0.0
        %483 = vmatprep.subr.mxu0 0.0
        %484 = vmatpush2.msra.mxu0 0.0
        %485 = vmatprep.subr.mxu0 0.0
        %486 = vmatpush2.msra.mxu0 0.0
        %487 = vmatprep.subr.mxu0 0.0
        %488 = vmatpush2.msra.mxu0 0.0
        %489 = vmatprep.subr.mxu0 0.0
        %490 = vmatpush2.msra.mxu0 0.0
        %491 = vmatprep.subr.mxu0 0.0
        %492 = vmatpush2.msra.mxu0 0.0
        %493 = vmatprep.subr.mxu0 0.0
        %494 = vmatpush2.msra.mxu0 0.0
        %495 = vmatprep.subr.mxu0 0.0
        %496 = vmatpush2.msra.mxu0 0.0
        %497 = vmatprep.subr.mxu0 0.0
        %498 = vmatpush2.msra.mxu0 0.0
        %499 = vmatprep.subr.mxu0 0.0
        %500 = vmatpush2.msra.mxu0 0.0
        %501 = vmatprep.subr.mxu0 0.0
        %502 = vmatpush2.msra.mxu0 0.0
        %503 = vmatprep.subr.mxu0 0.0
        %504 = vmatpush2.msra.mxu0 0.0
        %505 = vmatprep.subr.mxu0 0.0
        %506 = vmatpush2.msra.mxu0 0.0
        %507 = vmatprep.mubr.f32.mxu0 0.0
        %508 = vmatmul.mubr.f32.gmra.mxu0 %v435
        %v509 = vpop.f32.mrf.mxu0
        %v510 = vadd.f32 0.0, %v509
        %v511 = vpop.f32.mrf.mxu0
        %v512 = vadd.f32 0.0, %v511
        %513 = vmatprep.mubr.f32.mxu0 0.0
        %514 = vmatmul.mubr.f32.gmra.mxu0 %v438
        %v515 = vpop.f32.mrf.mxu0
        %v516 = vadd.f32 0.0, %v515
        %v517 = vpop.f32.mrf.mxu0
        %v518 = vadd.f32 0.0, %v517
        %519 = vmatprep.mubr.f32.mxu0 0.0
        %520 = vmatmul.mubr.f32.gmra.mxu0 %v441
        %v521 = vpop.f32.mrf.mxu0
        %v522 = vadd.f32 0.0, %v521
        %v523 = vpop.f32.mrf.mxu0
        %v524 = vadd.f32 0.0, %v523
        %525 = vdwg.mxu0
        %v526 = vadd.f32 %v408, %v510
        %v527 = vadd.f32 %v409, %v512
        %v528 = vadd.f32 %v410, %v516
        %v529 = vadd.f32 %v411, %v518
        %v530 = vadd.f32 %v412, %v522
        %v531 = vadd.f32 %v413, %v524
        %532 = vst [vmem:[%s273] sm:$0xff] %v526
        %533 = vst [vmem:[%s273 + $0x8] sm:$0xff] %v527
        %534 = vst [vmem:[%s273 + $0x10] sm:$0xff] %v528
        %535 = vst [vmem:[%s273 + $0x18] sm:$0xff] %v529
        %536 = vst [vmem:[%s273 + $0x20] sm:$0xff] %v530
        %537 = vst [vmem:[%s273 + $0x28] sm:$0xff] %v531
        %v538 = vld [vmem:[%s273] sm:$0xff]
        %v539 = vld [vmem:[%s273 + $0x8] sm:$0xff]
        %v540 = vld [vmem:[%s273 + $0x10] sm:$0xff]
        %v541 = vld [vmem:[%s273 + $0x18] sm:$0xff]
        %v542 = vld [vmem:[%s273 + $0x20] sm:$0xff]
        %v543 = vld [vmem:[%s273 + $0x28] sm:$0xff]
        %v544 = vld [vmem:[#allocation2 + $0x2] sm:$0xff]
        %v545 = vld [vmem:[#allocation2 + $0xa] sm:$0xff]
        %v546 = vld [vmem:[#allocation2 + $0x12] sm:$0xff]
        %s547 = scalar_lea.vmem [#allocation8], 256
        %v548 = vld [vmem:[%s547] sm:$0xff]
        %v549 = vld [vmem:[%s547 + $0x8] sm:$0xff]
        %v550 = vld [vmem:[%s547 + $0x10] sm:$0xff]
        %v551 = vld [vmem:[%s547 + $0x18] sm:$0xff]
        %v552 = vld [vmem:[%s547 + $0x20] sm:$0xff]
        %v553 = vld [vmem:[%s547 + $0x28] sm:$0xff]
        %v554 = vld [vmem:[%s547 + $0x30] sm:$0xff]
        %v555 = vld [vmem:[%s547 + $0x38] sm:$0xff]
        %v556 = vld [vmem:[%s547 + $0x40] sm:$0xff]
        %v557 = vld [vmem:[%s547 + $0x48] sm:$0xff]
        %v558 = vld [vmem:[%s547 + $0x50] sm:$0xff]
        %v559 = vld [vmem:[%s547 + $0x58] sm:$0xff]
        %v560 = vld [vmem:[%s547 + $0x60] sm:$0xff]
        %v561 = vld [vmem:[%s547 + $0x68] sm:$0xff]
        %v562 = vld [vmem:[%s547 + $0x70] sm:$0xff]
        %v563 = vld [vmem:[%s547 + $0x78] sm:$0xff]
        %v565 = vsel %vm285, %v544, 0
        %v568 = vsel %vm285, %v545, 0
        %v571 = vsel %vm285, %v546, 0
        %573 = vmatprep.subr.mxu0 0.0
        %574 = vmatpush1.msra.mxu0 0.0
        %575 = vmatprep.subr.mxu0 0.0
        %576 = vmatpush1.msra.mxu0 0.0
        %577 = vmatprep.subr.mxu0 0.0
        %578 = vmatpush1.msra.mxu0 0.0
        %579 = vmatprep.subr.mxu0 0.0
        %580 = vmatpush1.msra.mxu0 0.0
        %581 = vmatprep.subr.mxu0 0.0
        %582 = vmatpush1.msra.mxu0 0.0
        %583 = vmatprep.subr.mxu0 0.0
        %584 = vmatpush1.msra.mxu0 0.0
        %585 = vmatprep.subr.mxu0 0.0
        %586 = vmatpush1.msra.mxu0 0.0
        %587 = vmatprep.subr.mxu0 0.0
        %588 = vmatpush1.msra.mxu0 0.0
        %589 = vmatprep.subr.mxu0 %v563
        %590 = vmatpush1.msra.mxu0 %v562
        %591 = vmatprep.subr.mxu0 %v561
        %592 = vmatpush1.msra.mxu0 %v560
        %593 = vmatprep.subr.mxu0 %v559
        %594 = vmatpush1.msra.mxu0 %v558
        %595 = vmatprep.subr.mxu0 %v557
        %596 = vmatpush1.msra.mxu0 %v556
        %597 = vmatprep.subr.mxu0 %v555
        %598 = vmatpush1.msra.mxu0 %v554
        %599 = vmatprep.subr.mxu0 %v553
        %600 = vmatpush1.msra.mxu0 %v552
        %601 = vmatprep.subr.mxu0 %v551
        %602 = vmatpush1.msra.mxu0 %v550
        %603 = vmatprep.subr.mxu0 %v549
        %604 = vmatpush1.msra.mxu0 %v548
        %605 = vmatprep.subr.mxu0 0.0
        %606 = vmatpush2.msra.mxu0 0.0
        %607 = vmatprep.subr.mxu0 0.0
        %608 = vmatpush2.msra.mxu0 0.0
        %609 = vmatprep.subr.mxu0 0.0
        %610 = vmatpush2.msra.mxu0 0.0
        %611 = vmatprep.subr.mxu0 0.0
        %612 = vmatpush2.msra.mxu0 0.0
        %613 = vmatprep.subr.mxu0 0.0
        %614 = vmatpush2.msra.mxu0 0.0
        %615 = vmatprep.subr.mxu0 0.0
        %616 = vmatpush2.msra.mxu0 0.0
        %617 = vmatprep.subr.mxu0 0.0
        %618 = vmatpush2.msra.mxu0 0.0
        %619 = vmatprep.subr.mxu0 0.0
        %620 = vmatpush2.msra.mxu0 0.0
        %621 = vmatprep.subr.mxu0 0.0
        %622 = vmatpush2.msra.mxu0 0.0
        %623 = vmatprep.subr.mxu0 0.0
        %624 = vmatpush2.msra.mxu0 0.0
        %625 = vmatprep.subr.mxu0 0.0
        %626 = vmatpush2.msra.mxu0 0.0
        %627 = vmatprep.subr.mxu0 0.0
        %628 = vmatpush2.msra.mxu0 0.0
        %629 = vmatprep.subr.mxu0 0.0
        %630 = vmatpush2.msra.mxu0 0.0
        %631 = vmatprep.subr.mxu0 0.0
        %632 = vmatpush2.msra.mxu0 0.0
        %633 = vmatprep.subr.mxu0 0.0
        %634 = vmatpush2.msra.mxu0 0.0
        %635 = vmatprep.subr.mxu0 0.0
        %636 = vmatpush2.msra.mxu0 0.0
        %637 = vmatprep.mubr.f32.mxu0 0.0
        %638 = vmatmul.mubr.f32.gmra.mxu0 %v565
        %v639 = vpop.f32.mrf.mxu0
        %v640 = vadd.f32 0.0, %v639
        %v641 = vpop.f32.mrf.mxu0
        %v642 = vadd.f32 0.0, %v641
        %643 = vmatprep.mubr.f32.mxu0 0.0
        %644 = vmatmul.mubr.f32.gmra.mxu0 %v568
        %v645 = vpop.f32.mrf.mxu0
        %v646 = vadd.f32 0.0, %v645
        %v647 = vpop.f32.mrf.mxu0
        %v648 = vadd.f32 0.0, %v647
        %649 = vmatprep.mubr.f32.mxu0 0.0
        %650 = vmatmul.mubr.f32.gmra.mxu0 %v571
        %v651 = vpop.f32.mrf.mxu0
        %v652 = vadd.f32 0.0, %v651
        %v653 = vpop.f32.mrf.mxu0
        %v654 = vadd.f32 0.0, %v653
        %655 = vdwg.mxu0
        %v656 = vadd.f32 %v538, %v640
        %v657 = vadd.f32 %v539, %v642
        %v658 = vadd.f32 %v540, %v646
        %v659 = vadd.f32 %v541, %v648
        %v660 = vadd.f32 %v542, %v652
        %v661 = vadd.f32 %v543, %v654
        %662 = vst [vmem:[%s273] sm:$0xff] %v656
        %663 = vst [vmem:[%s273 + $0x8] sm:$0xff] %v657
        %664 = vst [vmem:[%s273 + $0x10] sm:$0xff] %v658
        %665 = vst [vmem:[%s273 + $0x18] sm:$0xff] %v659
        %666 = vst [vmem:[%s273 + $0x20] sm:$0xff] %v660
        %667 = vst [vmem:[%s273 + $0x28] sm:$0xff] %v661
        %v668 = vld [vmem:[%s273] sm:$0xff]
        %v669 = vld [vmem:[%s273 + $0x8] sm:$0xff]
        %v670 = vld [vmem:[%s273 + $0x10] sm:$0xff]
        %v671 = vld [vmem:[%s273 + $0x18] sm:$0xff]
        %v672 = vld [vmem:[%s273 + $0x20] sm:$0xff]
        %v673 = vld [vmem:[%s273 + $0x28] sm:$0xff]
        %v674 = vld [vmem:[#allocation2 + $0x3] sm:$0xff]
        %v675 = vld [vmem:[#allocation2 + $0xb] sm:$0xff]
        %v676 = vld [vmem:[#allocation2 + $0x13] sm:$0xff]
        %s677 = scalar_lea.vmem [#allocation8], 384
        %v678 = vld [vmem:[%s677] sm:$0xff]
        %v679 = vld [vmem:[%s677 + $0x8] sm:$0xff]
        %v680 = vld [vmem:[%s677 + $0x10] sm:$0xff]
        %v681 = vld [vmem:[%s677 + $0x18] sm:$0xff]
        %v682 = vld [vmem:[%s677 + $0x20] sm:$0xff]
        %v683 = vld [vmem:[%s677 + $0x28] sm:$0xff]
        %v684 = vld [vmem:[%s677 + $0x30] sm:$0xff]
        %v685 = vld [vmem:[%s677 + $0x38] sm:$0xff]
        %v686 = vld [vmem:[%s677 + $0x40] sm:$0xff]
        %v687 = vld [vmem:[%s677 + $0x48] sm:$0xff]
        %v688 = vld [vmem:[%s677 + $0x50] sm:$0xff]
        %v689 = vld [vmem:[%s677 + $0x58] sm:$0xff]
        %v690 = vld [vmem:[%s677 + $0x60] sm:$0xff]
        %v691 = vld [vmem:[%s677 + $0x68] sm:$0xff]
        %v692 = vld [vmem:[%s677 + $0x70] sm:$0xff]
        %v693 = vld [vmem:[%s677 + $0x78] sm:$0xff]
        %v695 = vsel %vm285, %v674, 0
        %v698 = vsel %vm285, %v675, 0
        %v701 = vsel %vm285, %v676, 0
        %703 = vmatprep.subr.mxu0 0.0
        %704 = vmatpush1.msra.mxu0 0.0
        %705 = vmatprep.subr.mxu0 0.0
        %706 = vmatpush1.msra.mxu0 0.0
        %707 = vmatprep.subr.mxu0 0.0
        %708 = vmatpush1.msra.mxu0 0.0
        %709 = vmatprep.subr.mxu0 0.0
        %710 = vmatpush1.msra.mxu0 0.0
        %711 = vmatprep.subr.mxu0 0.0
        %712 = vmatpush1.msra.mxu0 0.0
        %713 = vmatprep.subr.mxu0 0.0
        %714 = vmatpush1.msra.mxu0 0.0
        %715 = vmatprep.subr.mxu0 0.0
        %716 = vmatpush1.msra.mxu0 0.0
        %717 = vmatprep.subr.mxu0 0.0
        %718 = vmatpush1.msra.mxu0 0.0
        %719 = vmatprep.subr.mxu0 %v693
        %720 = vmatpush1.msra.mxu0 %v692
        %721 = vmatprep.subr.mxu0 %v691
        %722 = vmatpush1.msra.mxu0 %v690
        %723 = vmatprep.subr.mxu0 %v689
        %724 = vmatpush1.msra.mxu0 %v688
        %725 = vmatprep.subr.mxu0 %v687
        %726 = vmatpush1.msra.mxu0 %v686
        %727 = vmatprep.subr.mxu0 %v685
        %728 = vmatpush1.msra.mxu0 %v684
        %729 = vmatprep.subr.mxu0 %v683
        %730 = vmatpush1.msra.mxu0 %v682
        %731 = vmatprep.subr.mxu0 %v681
        %732 = vmatpush1.msra.mxu0 %v680
        %733 = vmatprep.subr.mxu0 %v679
        %734 = vmatpush1.msra.mxu0 %v678
        %735 = vmatprep.subr.mxu0 0.0
        %736 = vmatpush2.msra.mxu0 0.0
        %737 = vmatprep.subr.mxu0 0.0
        %738 = vmatpush2.msra.mxu0 0.0
        %739 = vmatprep.subr.mxu0 0.0
        %740 = vmatpush2.msra.mxu0 0.0
        %741 = vmatprep.subr.mxu0 0.0
        %742 = vmatpush2.msra.mxu0 0.0
        %743 = vmatprep.subr.mxu0 0.0
        %744 = vmatpush2.msra.mxu0 0.0
        %745 = vmatprep.subr.mxu0 0.0
        %746 = vmatpush2.msra.mxu0 0.0
        %747 = vmatprep.subr.mxu0 0.0
        %748 = vmatpush2.msra.mxu0 0.0
        %749 = vmatprep.subr.mxu0 0.0
        %750 = vmatpush2.msra.mxu0 0.0
        %751 = vmatprep.subr.mxu0 0.0
        %752 = vmatpush2.msra.mxu0 0.0
        %753 = vmatprep.subr.mxu0 0.0
        %754 = vmatpush2.msra.mxu0 0.0
        %755 = vmatprep.subr.mxu0 0.0
        %756 = vmatpush2.msra.mxu0 0.0
        %757 = vmatprep.subr.mxu0 0.0
        %758 = vmatpush2.msra.mxu0 0.0
        %759 = vmatprep.subr.mxu0 0.0
        %760 = vmatpush2.msra.mxu0 0.0
        %761 = vmatprep.subr.mxu0 0.0
        %762 = vmatpush2.msra.mxu0 0.0
        %763 = vmatprep.subr.mxu0 0.0
        %764 = vmatpush2.msra.mxu0 0.0
        %765 = vmatprep.subr.mxu0 0.0
        %766 = vmatpush2.msra.mxu0 0.0
        %767 = vmatprep.mubr.f32.mxu0 0.0
        %768 = vmatmul.mubr.f32.gmra.mxu0 %v695
        %v769 = vpop.f32.mrf.mxu0
        %v770 = vadd.f32 0.0, %v769
        %v771 = vpop.f32.mrf.mxu0
        %v772 = vadd.f32 0.0, %v771
        %773 = vmatprep.mubr.f32.mxu0 0.0
        %774 = vmatmul.mubr.f32.gmra.mxu0 %v698
        %v775 = vpop.f32.mrf.mxu0
        %v776 = vadd.f32 0.0, %v775
        %v777 = vpop.f32.mrf.mxu0
        %v778 = vadd.f32 0.0, %v777
        %779 = vmatprep.mubr.f32.mxu0 0.0
        %780 = vmatmul.mubr.f32.gmra.mxu0 %v701
        %v781 = vpop.f32.mrf.mxu0
        %v782 = vadd.f32 0.0, %v781
        %v783 = vpop.f32.mrf.mxu0
        %v784 = vadd.f32 0.0, %v783
        %785 = vdwg.mxu0
        %v786 = vadd.f32 %v668, %v770
        %v787 = vadd.f32 %v669, %v772
        %v788 = vadd.f32 %v670, %v776
        %v789 = vadd.f32 %v671, %v778
        %v790 = vadd.f32 %v672, %v782
        %v791 = vadd.f32 %v673, %v784
        %792 = vst [vmem:[%s273] sm:$0xff] %v786
        %793 = vst [vmem:[%s273 + $0x8] sm:$0xff] %v787
        %794 = vst [vmem:[%s273 + $0x10] sm:$0xff] %v788
        %795 = vst [vmem:[%s273 + $0x18] sm:$0xff] %v789
        %796 = vst [vmem:[%s273 + $0x20] sm:$0xff] %v790
        %797 = vst [vmem:[%s273 + $0x28] sm:$0xff] %v791
        %s798 = sand.u32 %s126, 1
        %s799 = scalar_lea.sflag [#allocation5], %s798
        %s800 = sand.u32 %s126, 1
        %s801 = smul.addr %s800, 48
        %s802 = scalar_lea.vmem [#allocation9], %s801
        // Predicated region
        $region45: #{tpu_custom_call.1} parent=31 // pred_check
          %p803 = pneg %p136
        $region46: #{tpu_custom_call.1} parent=31 // pred_check_branch
          %805 = sbr.rel (%p803) target = $region48
        $region47: #{tpu_custom_call.1} parent=31 // pred_region
          %s806 = smul.u32 3, %s28
          %s808 = ssub.s32 768, 768
          %809 = vsyncadd %s799, %s808
          %s810 = smul.addr %s806, 2
          %s811 = smul.addr %s27, 6
          %s812 = sadd.s32 %s810, %s811
          %s813 = smul.addr %s812, 128
          %s814 = scalar_lea.hbm %s3, %s813
          %s815 = sshll.u32 %s802, 4
          %s816 = int_to_ptr.vmem [resolvable:$true] %s815
          %821 = dma.vmem_to_hbm [thread:$0]  %s816, 768, %s814, %s799, 256, 256, 16
        $region48: #{tpu_custom_call.1} parent=31 // pred_fallthru
          _
      $region32: #{tpu_custom_call.1} parent=5 // pred_fallthru
        _
      %p822 = scmp.le.s32.totalorder 2, %s18
      // Predicated region
      $region49: #{tpu_custom_call.1} parent=5 // pred_check
        %p823 = pneg %p822
      $region50: #{tpu_custom_call.1} parent=5 // pred_check_branch
        %825 = sbr.rel (%p823) target = $region52
      $region51: #{tpu_custom_call.1} parent=5 // pred_region
        %s826 = ssub.s32 %s18, 2
        // Predicated region
        $region53: #{tpu_custom_call.1} parent=51 // pred_check
          %p827 = pneg %p142
        $region54: #{tpu_custom_call.1} parent=51 // pred_check_branch
          %829 = sbr.rel (%p827) target = $region56
        $region55: #{tpu_custom_call.1} parent=51 // pred_region
          %s830 = sand.u32 %s127, 1
          %s831 = scalar_lea.sflag [#allocation5], %s830
          %s832 = sand.u32 %s127, 1
          %s833 = smul.addr %s832, 48
          %s834 = scalar_lea.vmem [#allocation9], %s833
          %835 = dma.done %s831, 768
        $region56: #{tpu_custom_call.1} parent=51 // pred_fallthru
          _
      $region52: #{tpu_custom_call.1} parent=5 // pred_fallthru
        _
    $region6: #{tpu_custom_call.1} parent=1 // loop_footer
      %s22 = sadd.s32 1, %s18
    $region7: #{tpu_custom_call.1} parent=1 // loop_footer_branch
      %17 = sbr.rel target = $region3
    $region8: #{tpu_custom_call.1} parent=1 // loop_exit
      _
    %836 = vsyncpa [#allocation4], 1
    %s837 = scalar_lea.sflag [#allocation4], 1
    %838 = vsyncpa %s837, 1
    %839 = vsyncpa [#allocation7], 1
    %s840 = scalar_lea.sflag [#allocation7], 1
    %841 = vsyncpa %s840, 1
    %842 = vsyncpa [#allocation5], 1
    %s843 = scalar_lea.sflag [#allocation5], 1
    %844 = vsyncpa %s843, 1

</llo_original>
